<compile_context>
chip_gen: v7x
topology: tpu7x:2x2x1
jax: 0.10.0
libtpu: 0.0.40
codegen_flags: <defaults>
</compile_context>

<pallas_src>
import functools

import jax
import jax.numpy as jnp
import numpy as np
from jax import lax
from jax.experimental import pallas as pl
from jax.experimental.pallas import tpu as pltpu


def _fused_cnn_kernel(x_ref, m1_ref, b1_ref, m2_ref, b2_ref, o_ref, *,
                      N, H1p, H2, KH, R1, R2):
    """Fused (Conv2d + bias + ReLU) x 2, fully VMEM resident, lane-dense.

    x_ref:  (N*H1p, W1p*C0)    padded input rows, flat over batch (no kh dup)
    m1_ref: (KH, W1p*C0, W1*C1) block-1 band weights (kw sweep + channel mix)
    b1_ref: (1, W1*C1)          block-1 bias tiled over W1
    m2_ref: (KH, W1*C1, Lout)   block-2 band weights, lane-padded to Lout
    b2_ref: (1, Lout)           block-2 bias tiled over W2, lane-padded
    o_ref:  (N*H2, Lout)        flat lane-dense output
    """
    # ---- Block 1: KH matmuls over kh-shifted row windows of ONE slab. -------
    acc1 = jnp.dot(x_ref[0:R1, :], m1_ref[0],
                   preferred_element_type=jnp.float32)
    for kh in range(1, KH):
        acc1 = acc1 + jnp.dot(x_ref[kh:kh + R1, :], m1_ref[kh],
                              preferred_element_type=jnp.float32)
    # (R1, W1*C1): rows straddling a batch boundary are garbage but finite;
    # they never reach the output (dropped at the stores below).
    act1 = jnp.maximum(acc1 + b1_ref[...], 0.0)

    # ---- Block 2: batched over N — KH matmuls over the full act1 slab. ------
    acc2 = jnp.dot(act1[0:R2, :], m2_ref[0],
                   preferred_element_type=jnp.float32)
    for kh in range(1, KH):
        acc2 = acc2 + jnp.dot(act1[kh:kh + R2, :], m2_ref[kh],
                              preferred_element_type=jnp.float32)
    act2 = jnp.maximum(acc2 + b2_ref[...], 0.0)          # (R2, Lout)

    # ---- Store only the valid (non-boundary) rows per batch element. --------
    for n in range(N):
        o_ref[n * H2:(n + 1) * H2, :] = (
            act2[n * H1p:n * H1p + H2, :].astype(o_ref.dtype))


def _band_weight(w_oihw, w_in, w_out):
    """OIHW conv weight -> per-kh band matrices (KH, w_in*C_in, w_out*C_out).

    M[kh, wi*C_in + ci, wo*C_out + co] = W[co, ci, kh, wi-wo] for 0 <= wi-wo < KW,
    so a row-wise matmul computes the kw sweep + channel mix in one MXU pass.
    """
    C_out, C_in, KH, KW = w_oihw.shape
    w_hwio = jnp.transpose(w_oihw, (2, 3, 1, 0))           # (KH, KW, C_in, C_out)
    wi = jnp.arange(w_in)[:, None, None]
    kw = jnp.arange(KW)[None, :, None]
    wo = jnp.arange(w_out)[None, None, :]
    sel = (wi == wo + kw).astype(w_hwio.dtype)             # (w_in, KW, w_out)
    m = jnp.einsum('ikw,hkco->hicwo', sel, w_hwio)         # (KH, w_in, C_in, w_out, C_out)
    return m.reshape(KH, w_in * C_in, w_out * C_out)


def make_cnn_forward(w1, b1, w2, b2, *, input_shape, pad1=1, pad2=0):
    """Precompute band weights ONCE; return a jitted NCHW -> NCHW forward."""
    C0, H0, W0 = input_shape
    C1, _, KH, KW = w1.shape
    C2 = w2.shape[0]
    assert pad2 == 0, "block-2 padding folded only for padding=0 in this config"
    # TODO(synk): stride/dilation/groups != 1, batch-norm, dropout, pooling and
    # the optional MLP head are not exercised by this module config and are not
    # implemented in this fused path.

    H1p, W1p = H0 + 2 * pad1, W0 + 2 * pad1
    H1, W1 = H1p - KH + 1, W1p - KW + 1
    H2, W2 = H1 - KH + 1, W1 - KW + 1

    # ---- One-time parameter prep (hoisted out of the per-call path). --------
    lanes_valid = W2 * C2
    lanes_out = ((lanes_valid + 127) // 128) * 128     # 224 -> 256: unmasked MXU/vst
    m1 = _band_weight(w1, W1p, W1)                     # (KH, W1p*C0, W1*C1)
    m2 = jnp.pad(_band_weight(w2, W1, W2),
                 ((0, 0), (0, 0), (0, lanes_out - lanes_valid)))
    b1_row = jnp.tile(b1, W1).reshape(1, W1 * C1)
    b2_row = jnp.pad(jnp.tile(b2, W2),
                     (0, lanes_out - lanes_valid)).reshape(1, lanes_out)

    @jax.jit
    def forward(x_nchw, m1, b1_row, m2, b2_row):
        N = x_nchw.shape[0]
        R1 = N * H1p - (KH - 1)      # block-1 result rows (incl. boundary garbage)
        R2 = R1 - (KH - 1)           # block-2 result rows

        # --- x-side glue: NCHW -> padded lane-dense rows (single fusion). ----
        x_nhwc = jnp.transpose(x_nchw, (0, 2, 3, 1))
        x_pad = jnp.pad(x_nhwc, ((0, 0), (pad1, pad1), (pad1, pad1), (0, 0)))
        x_rows = x_pad.reshape(N * H1p, W1p * C0)

        kernel = functools.partial(_fused_cnn_kernel, N=N, H1p=H1p, H2=H2,
                                   KH=KH, R1=R1, R2=R2)
        flops = 2 * KH * (R1 * (W1p * C0) * (W1 * C1)
                          + R2 * (W1 * C1) * lanes_out)
        bytes_accessed = 4 * (x_rows.size + m1.size + m2.size
                              + b1_row.size + b2_row.size + N * H2 * lanes_out)

        out_rows = pl.pallas_call(
            kernel,
            out_shape=jax.ShapeDtypeStruct((N * H2, lanes_out), x_nchw.dtype),
            in_specs=[pl.BlockSpec(memory_space=pltpu.MemorySpace.VMEM)] * 5,
            out_specs=pl.BlockSpec(memory_space=pltpu.MemorySpace.VMEM),
            cost_estimate=pl.CostEstimate(flops=flops, transcendentals=0,
                                          bytes_accessed=bytes_accessed),
        )(x_rows, m1, b1_row, m2, b2_row)

        # --- output glue: drop pad lanes, lane-dense rows -> NCHW. ------------
        out = out_rows[:, :lanes_valid].reshape(N, H2, W2, C2)
        return jnp.transpose(out, (0, 3, 1, 2))

    return lambda x: forward(x, m1, b1_row, m2, b2_row)


def _ref_conv_relu(x, w, b, padding):
    y = lax.conv_general_dilated(
        x, w, window_strides=(1, 1),
        padding=[(padding, padding), (padding, padding)],
        dimension_numbers=('NCHW', 'OIHW', 'NCHW'))
    return jnp.maximum(y + b[None, :, None, None], 0.0)


if __name__ == "__main__":
    key = jax.random.PRNGKey(0)
    k_x, k_w1, k_b1, k_w2, k_b2 = jax.random.split(key, 5)

    # Input: batch=2, channels=4, spatial=16x16 (NCHW, matching PyTorch).
    x = jax.random.normal(k_x, (2, 4, 16, 16), dtype=jnp.float32)

    # Deterministic parameter init (shapes dictated by the module config).
    w1 = jax.random.normal(k_w1, (8, 4, 3, 3), dtype=jnp.float32) * 0.1
    b1 = jax.random.normal(k_b1, (8,), dtype=jnp.float32) * 0.1
    w2 = jax.random.normal(k_w2, (16, 8, 3, 3), dtype=jnp.float32) * 0.1
    b2 = jax.random.normal(k_b2, (16,), dtype=jnp.float32) * 0.1

    cnn_forward = make_cnn_forward(w1, b1, w2, b2, input_shape=(4, 16, 16),
                                   pad1=1, pad2=0)
    out = jax.block_until_ready(cnn_forward(x))

    # Reference check against XLA conv.
    ref = _ref_conv_relu(x, w1, b1, 1)
    ref = _ref_conv_relu(ref, w2, b2, 0)
    ref = jax.block_until_ready(ref)

    assert out.shape == (2, 16, 14, 14), out.shape
    np.testing.assert_allclose(np.asarray(out), np.asarray(ref),
                               rtol=1e-4, atol=1e-4)
    print("KERNEL_OK")
</pallas_src>

<mosaic_0001>
module attributes {stable_mosaic.version = 11 : i64} {
  func.func @_fused_cnn_kernel(%arg0: memref<36x72xf32, #tpu.memory_space<vmem>>, %arg1: memref<3x72x128xf32, #tpu.memory_space<vmem>>, %arg2: memref<1x128xf32, #tpu.memory_space<vmem>>, %arg3: memref<3x128x256xf32, #tpu.memory_space<vmem>>, %arg4: memref<1x256xf32, #tpu.memory_space<vmem>>, %arg5: memref<28x256xf32, #tpu.memory_space<vmem>>) attributes {dimension_semantics = [], scalar_prefetch = 0 : i64, scratch_operands = 0 : i64, tpu.core_type = #tpu.core_type<tc>} {
    %c0 = arith.constant 0 : index
    %c0_0 = arith.constant 0 : index
    %0 = vector.load %arg0[%c0, %c0_0] : memref<36x72xf32, #tpu.memory_space<vmem>>, vector<34x72xf32>
    %c0_1 = arith.constant 0 : index
    %c0_2 = arith.constant 0 : index
    %c0_3 = arith.constant 0 : index
    %1 = vector.load %arg1[%c0_1, %c0_2, %c0_3] : memref<3x72x128xf32, #tpu.memory_space<vmem>>, vector<1x72x128xf32>
    %2 = vector.shape_cast %1 : vector<1x72x128xf32> to vector<72x128xf32>
    %cst = arith.constant dense<0.000000e+00> : vector<34x128xf32>
    %3 = tpu.matmul %0, %2, %cst {dimension_numbers = #tpu.dot_dimension_numbers<[1], [0], [0], [1], [0, 0, 1, 1], [], []>} : vector<34x72xf32>, vector<72x128xf32>, vector<34x128xf32> -> vector<34x128xf32>
    %c1 = arith.constant 1 : index
    %c0_4 = arith.constant 0 : index
    %4 = vector.load %arg0[%c1, %c0_4] : memref<36x72xf32, #tpu.memory_space<vmem>>, vector<34x72xf32>
    %c1_5 = arith.constant 1 : index
    %c0_6 = arith.constant 0 : index
    %c0_7 = arith.constant 0 : index
    %5 = vector.load %arg1[%c1_5, %c0_6, %c0_7] : memref<3x72x128xf32, #tpu.memory_space<vmem>>, vector<1x72x128xf32>
    %6 = vector.shape_cast %5 : vector<1x72x128xf32> to vector<72x128xf32>
    %cst_8 = arith.constant dense<0.000000e+00> : vector<34x128xf32>
    %7 = tpu.matmul %4, %6, %cst_8 {dimension_numbers = #tpu.dot_dimension_numbers<[1], [0], [0], [1], [0, 0, 1, 1], [], []>} : vector<34x72xf32>, vector<72x128xf32>, vector<34x128xf32> -> vector<34x128xf32>
    %8 = arith.addf %3, %7 : vector<34x128xf32>
    %c2 = arith.constant 2 : index
    %c0_9 = arith.constant 0 : index
    %9 = vector.load %arg0[%c2, %c0_9] : memref<36x72xf32, #tpu.memory_space<vmem>>, vector<34x72xf32>
    %c2_10 = arith.constant 2 : index
    %c0_11 = arith.constant 0 : index
    %c0_12 = arith.constant 0 : index
    %10 = vector.load %arg1[%c2_10, %c0_11, %c0_12] : memref<3x72x128xf32, #tpu.memory_space<vmem>>, vector<1x72x128xf32>
    %11 = vector.shape_cast %10 : vector<1x72x128xf32> to vector<72x128xf32>
    %cst_13 = arith.constant dense<0.000000e+00> : vector<34x128xf32>
    %12 = tpu.matmul %9, %11, %cst_13 {dimension_numbers = #tpu.dot_dimension_numbers<[1], [0], [0], [1], [0, 0, 1, 1], [], []>} : vector<34x72xf32>, vector<72x128xf32>, vector<34x128xf32> -> vector<34x128xf32>
    %13 = arith.addf %8, %12 : vector<34x128xf32>
    %c0_14 = arith.constant 0 : index
    %c0_15 = arith.constant 0 : index
    %14 = vector.load %arg2[%c0_14, %c0_15] : memref<1x128xf32, #tpu.memory_space<vmem>>, vector<1x128xf32>
    %15 = vector.broadcast %14 : vector<1x128xf32> to vector<34x128xf32>
    %16 = arith.addf %13, %15 : vector<34x128xf32>
    %cst_16 = arith.constant 0.000000e+00 : f32
    %17 = vector.broadcast %cst_16 : f32 to vector<34x128xf32>
    %18 = arith.maximumf %16, %17 : vector<34x128xf32>
    %19 = vector.extract_strided_slice %18 {offsets = [0, 0], sizes = [32, 128], strides = [1, 1]} : vector<34x128xf32> to vector<32x128xf32>
    %c0_17 = arith.constant 0 : index
    %c0_18 = arith.constant 0 : index
    %c0_19 = arith.constant 0 : index
    %20 = vector.load %arg3[%c0_17, %c0_18, %c0_19] : memref<3x128x256xf32, #tpu.memory_space<vmem>>, vector<1x128x256xf32>
    %21 = vector.shape_cast %20 : vector<1x128x256xf32> to vector<128x256xf32>
    %cst_20 = arith.constant dense<0.000000e+00> : vector<32x256xf32>
    %22 = tpu.matmul %19, %21, %cst_20 {dimension_numbers = #tpu.dot_dimension_numbers<[1], [0], [0], [1], [0, 0, 1, 1], [], []>} : vector<32x128xf32>, vector<128x256xf32>, vector<32x256xf32> -> vector<32x256xf32>
    %23 = vector.extract_strided_slice %18 {offsets = [1, 0], sizes = [32, 128], strides = [1, 1]} : vector<34x128xf32> to vector<32x128xf32>
    %c1_21 = arith.constant 1 : index
    %c0_22 = arith.constant 0 : index
    %c0_23 = arith.constant 0 : index
    %24 = vector.load %arg3[%c1_21, %c0_22, %c0_23] : memref<3x128x256xf32, #tpu.memory_space<vmem>>, vector<1x128x256xf32>
    %25 = vector.shape_cast %24 : vector<1x128x256xf32> to vector<128x256xf32>
    %cst_24 = arith.constant dense<0.000000e+00> : vector<32x256xf32>
    %26 = tpu.matmul %23, %25, %cst_24 {dimension_numbers = #tpu.dot_dimension_numbers<[1], [0], [0], [1], [0, 0, 1, 1], [], []>} : vector<32x128xf32>, vector<128x256xf32>, vector<32x256xf32> -> vector<32x256xf32>
    %27 = arith.addf %22, %26 : vector<32x256xf32>
    %28 = vector.extract_strided_slice %18 {offsets = [2, 0], sizes = [32, 128], strides = [1, 1]} : vector<34x128xf32> to vector<32x128xf32>
    %c2_25 = arith.constant 2 : index
    %c0_26 = arith.constant 0 : index
    %c0_27 = arith.constant 0 : index
    %29 = vector.load %arg3[%c2_25, %c0_26, %c0_27] : memref<3x128x256xf32, #tpu.memory_space<vmem>>, vector<1x128x256xf32>
    %30 = vector.shape_cast %29 : vector<1x128x256xf32> to vector<128x256xf32>
    %cst_28 = arith.constant dense<0.000000e+00> : vector<32x256xf32>
    %31 = tpu.matmul %28, %30, %cst_28 {dimension_numbers = #tpu.dot_dimension_numbers<[1], [0], [0], [1], [0, 0, 1, 1], [], []>} : vector<32x128xf32>, vector<128x256xf32>, vector<32x256xf32> -> vector<32x256xf32>
    %32 = arith.addf %27, %31 : vector<32x256xf32>
    %c0_29 = arith.constant 0 : index
    %c0_30 = arith.constant 0 : index
    %33 = vector.load %arg4[%c0_29, %c0_30] : memref<1x256xf32, #tpu.memory_space<vmem>>, vector<1x256xf32>
    %34 = vector.broadcast %33 : vector<1x256xf32> to vector<32x256xf32>
    %35 = arith.addf %32, %34 : vector<32x256xf32>
    %cst_31 = arith.constant 0.000000e+00 : f32
    %36 = vector.broadcast %cst_31 : f32 to vector<32x256xf32>
    %37 = arith.maximumf %35, %36 : vector<32x256xf32>
    %38 = vector.extract_strided_slice %37 {offsets = [0, 0], sizes = [14, 256], strides = [1, 1]} : vector<32x256xf32> to vector<14x256xf32>
    %c0_32 = arith.constant 0 : index
    %c0_33 = arith.constant 0 : index
    %39 = vector.load %arg5[%c0_32, %c0_33] : memref<28x256xf32, #tpu.memory_space<vmem>>, vector<14x256xf32>
    tpu.vector_store %arg5[%c0_32, %c0_33], %38 {strides = array<i32>} : memref<28x256xf32, #tpu.memory_space<vmem>>, vector<14x256xf32>,
    %40 = vector.extract_strided_slice %37 {offsets = [18, 0], sizes = [14, 256], strides = [1, 1]} : vector<32x256xf32> to vector<14x256xf32>
    %c14 = arith.constant 14 : index
    %c0_34 = arith.constant 0 : index
    %41 = vector.load %arg5[%c14, %c0_34] : memref<28x256xf32, #tpu.memory_space<vmem>>, vector<14x256xf32>
    tpu.vector_store %arg5[%c14, %c0_34], %40 {strides = array<i32>} : memref<28x256xf32, #tpu.memory_space<vmem>>, vector<14x256xf32>,
    return
  }
}

</mosaic_0001>

<llo_original>
// kernel: forward.1
$region0: #{forward.1}
  #allocation0 [shape = 'u32[]', space=smem, size = 0x4, offset = 0x4, fixed_abs, tag = 'smem constant byte address 0x4 - core index']
  #allocation1 [shape = 'u32[144,128]{1,0:T(1,128)}', space=vmem, size = 0x12000, scoped, tag = 'internal scratch']
  %s0 = inlined_call_operand.vmem [shape: f32[36,72], index: 0, kind: input, shape index: {}]
  %s1 = inlined_call_operand.hbm [shape: f32[3,72,128], index: 1, kind: input, shape index: {}]
  %s2 = inlined_call_operand.vmem [shape: f32[1,128], index: 2, kind: input, shape index: {}]
  %s3 = inlined_call_operand.vmem [shape: f32[3,128,256], index: 3, kind: input, shape index: {}]
  %s4 = inlined_call_operand.vmem [shape: f32[1,256], index: 4, kind: input, shape index: {}]
  %s5 = inlined_call_operand.vmem [shape: f32[28,256], index: 5, kind: output, shape index: {}]
  %s6 = sld [smem:[#allocation0]]
  $region34: #{forward.1} parent=0
    _
  %s8 = ssub.s32 1, %s6
  %s9 = scalar_select 0, %s8, %s6
  $region1: #{forward.1} parent=0
    #allocation2 [shape = 'u8[110592]{0}', space=vmem, size = 0x1b000, scoped, tag = 'input window, operand 1, single buffered']
    #allocation3 [shape = 's32[1]{0}', space=sflag, size = 0x4, scoped, tag = 'scoped memory for forward.1']
    %10 = vsyncpa [#allocation3], 0
    // Predicated region
    $region2: #{forward.1} parent=1 // pred_check
      _
    $region3: #{forward.1} parent=1 // pred_check_branch
      %12 = sbr.rel (0) target = $region5
    $region4: #{forward.1} parent=1 // pred_region
      _
    $region5: #{forward.1} parent=1 // pred_fallthru
      _
    // Predicated region
    $region6: #{forward.1} parent=1 // pred_check
      _
    $region7: #{forward.1} parent=1 // pred_check_branch
      %14 = sbr.rel (0) target = $region9
    $region8: #{forward.1} parent=1 // pred_region
      %s16 = ssub.s32 3456, 3456
      %17 = vsyncadd [#allocation3], %s16
      %s18 = sshll.u32 [#allocation2], 4
      %s19 = int_to_ptr.vmem [resolvable:$true] %s18
      %24 = dma.hbm_to_vmem [thread:$0]  %s1, 3456, %s19, [#allocation3], 128, 128, 8
    $region9: #{forward.1} parent=1 // pred_fallthru
      _
    // Predicated region
    $region10: #{forward.1} parent=1 // pred_check
      _
    $region11: #{forward.1} parent=1 // pred_check_branch
      %26 = sbr.rel (0) target = $region13
    $region12: #{forward.1} parent=1 // pred_region
      _
    $region13: #{forward.1} parent=1 // pred_fallthru
      _
    // Predicated region
    $region14: #{forward.1} parent=1 // pred_check
      _
    $region15: #{forward.1} parent=1 // pred_check_branch
      %28 = sbr.rel (0) target = $region17
    $region16: #{forward.1} parent=1 // pred_region
      _
    $region17: #{forward.1} parent=1 // pred_fallthru
      _
    // Predicated region
    $region18: #{forward.1} parent=1 // pred_check
      _
    $region19: #{forward.1} parent=1 // pred_check_branch
      %30 = sbr.rel (0) target = $region21
    $region20: #{forward.1} parent=1 // pred_region
      _
    $region21: #{forward.1} parent=1 // pred_fallthru
      _
    // Predicated region
    $region22: #{forward.1} parent=1 // pred_check
      _
    $region23: #{forward.1} parent=1 // pred_check_branch
      %32 = sbr.rel (0) target = $region25
    $region24: #{forward.1} parent=1 // pred_region
      %33 = dma.done [#allocation3], 3456
    $region25: #{forward.1} parent=1 // pred_fallthru
      _
    %v34 = vld [vmem:[%s0] sm:$0xff]
    %v35 = vld [vmem:[%s0 + $0x8] sm:$0xff]
    %v36 = vld [vmem:[%s0 + $0x10] sm:$0xff]
    %v37 = vld [vmem:[%s0 + $0x18] sm:$0xff]
    %v38 = vld [vmem:[%s0 + $0x20] sm:$0x3]
    %v39 = vld [vmem:[#allocation2] sm:$0xff]
    %v40 = vld [vmem:[#allocation2 + $0x8] sm:$0xff]
    %v41 = vld [vmem:[#allocation2 + $0x10] sm:$0xff]
    %v42 = vld [vmem:[#allocation2 + $0x18] sm:$0xff]
    %v43 = vld [vmem:[#allocation2 + $0x20] sm:$0xff]
    %v44 = vld [vmem:[#allocation2 + $0x28] sm:$0xff]
    %v45 = vld [vmem:[#allocation2 + $0x30] sm:$0xff]
    %v46 = vld [vmem:[#allocation2 + $0x38] sm:$0xff]
    %v47 = vld [vmem:[#allocation2 + $0x40] sm:$0xff]
    %v48 = vld [vmem:[%s0 + $0x1] sm:$0xff]
    %v49 = vld [vmem:[%s0 + $0x9] sm:$0xff]
    %v50 = vld [vmem:[%s0 + $0x11] sm:$0xff]
    %v51 = vld [vmem:[%s0 + $0x19] sm:$0xff]
    %v52 = vld [vmem:[%s0 + $0x21] sm:$0x3]
    %s53 = scalar_lea.vmem [#allocation2], 72
    %v54 = vld [vmem:[%s53] sm:$0xff]
    %v55 = vld [vmem:[%s53 + $0x8] sm:$0xff]
    %v56 = vld [vmem:[%s53 + $0x10] sm:$0xff]
    %v57 = vld [vmem:[%s53 + $0x18] sm:$0xff]
    %v58 = vld [vmem:[%s53 + $0x20] sm:$0xff]
    %v59 = vld [vmem:[%s53 + $0x28] sm:$0xff]
    %v60 = vld [vmem:[%s53 + $0x30] sm:$0xff]
    %v61 = vld [vmem:[%s53 + $0x38] sm:$0xff]
    %v62 = vld [vmem:[%s53 + $0x40] sm:$0xff]
    %vm63 = vcmask 588800
    %v65 = vsel %vm63, %v48, 0
    %v68 = vsel %vm63, %v49, 0
    %v71 = vsel %vm63, %v50, 0
    %v74 = vsel %vm63, %v51, 0
    %v77 = vsel %vm63, %v52, 0
    %79 = vmatprep.subr.mxu0 0.0
    %80 = vmatpush1.msra.mxu0 %v54
    %81 = vmatprep.subr.mxu0 0.0
    %82 = vmatpush1.msra.mxu0 %v55
    %83 = vmatprep.subr.mxu0 0.0
    %84 = vmatpush1.msra.mxu0 %v56
    %85 = vmatprep.subr.mxu0 0.0
    %86 = vmatpush1.msra.mxu0 %v57
    %87 = vmatprep.subr.mxu0 0.0
    %88 = vmatpush1.msra.mxu0 %v58
    %89 = vmatprep.subr.mxu0 0.0
    %90 = vmatpush1.msra.mxu0 %v59
    %91 = vmatprep.subr.mxu0 0.0
    %92 = vmatpush1.msra.mxu0 %v60
    %93 = vmatprep.subr.mxu0 0.0
    %94 = vmatpush1.msra.mxu0 %v61
    %95 = vmatprep.subr.mxu0 0.0
    %96 = vmatpush1.msra.mxu0 %v62
    %97 = vmatprep.subr.mxu0 0.0
    %98 = vmatpush1.msra.mxu0 0.0
    %99 = vmatprep.subr.mxu0 0.0
    %100 = vmatpush1.msra.mxu0 0.0
    %101 = vmatprep.subr.mxu0 0.0
    %102 = vmatpush1.msra.mxu0 0.0
    %103 = vmatprep.subr.mxu0 0.0
    %104 = vmatpush1.msra.mxu0 0.0
    %105 = vmatprep.subr.mxu0 0.0
    %106 = vmatpush1.msra.mxu0 0.0
    %107 = vmatprep.subr.mxu0 0.0
    %108 = vmatpush1.msra.mxu0 0.0
    %109 = vmatprep.subr.mxu0 0.0
    %110 = vmatpush1.msra.mxu0 0.0
    %111 = vmatprep.subr.mxu0 0.0
    %112 = vmatpush1.msra.mxu0 0.0
    %113 = vmatprep.subr.mxu0 0.0
    %114 = vmatpush1.msra.mxu0 0.0
    %115 = vmatprep.subr.mxu0 0.0
    %116 = vmatpush1.msra.mxu0 0.0
    %117 = vmatprep.subr.mxu0 0.0
    %118 = vmatpush1.msra.mxu0 0.0
    %119 = vmatprep.subr.mxu0 0.0
    %120 = vmatpush1.msra.mxu0 0.0
    %121 = vmatprep.subr.mxu0 0.0
    %122 = vmatpush1.msra.mxu0 0.0
    %123 = vmatprep.subr.mxu0 0.0
    %124 = vmatpush1.msra.mxu0 0.0
    %125 = vmatprep.subr.mxu0 0.0
    %126 = vmatpush1.msra.mxu0 0.0
    %127 = vmatprep.subr.mxu0 0.0
    %128 = vmatpush1.msra.mxu0 0.0
    %129 = vmatprep.subr.mxu0 0.0
    %130 = vmatpush1.msra.mxu0 0.0
    %131 = vmatprep.subr.mxu0 0.0
    %132 = vmatpush1.msra.mxu0 0.0
    %133 = vmatprep.subr.mxu0 0.0
    %134 = vmatpush1.msra.mxu0 0.0
    %135 = vmatprep.subr.mxu0 0.0
    %136 = vmatpush1.msra.mxu0 0.0
    %137 = vmatprep.subr.mxu0 0.0
    %138 = vmatpush1.msra.mxu0 0.0
    %139 = vmatprep.subr.mxu0 0.0
    %140 = vmatpush1.msra.mxu0 0.0
    %141 = vmatprep.subr.mxu0 0.0
    %142 = vmatpush1.msra.mxu0 0.0
    %143 = vmatprep.mubr.f32.mxu0 0.0
    %144 = vmatmul.mubr.f32.gmra.mrb[0].mxu0 %v65
    %v145 = vpop.f32.mrb[0].mxu0
    %v146 = vadd.f32 0.0, %v145
    %v147 = vpop.f32.mrb[0].mxu0
    %148 = vmatprep.mubr.f32.mxu0 0.0
    %149 = vmatmul.mubr.f32.gmra.mrb[0].mxu0 %v68
    %v150 = vpop.f32.mrb[0].mxu0
    %v151 = vadd.f32 0.0, %v150
    %v152 = vpop.f32.mrb[0].mxu0
    %153 = vmatprep.mubr.f32.mxu0 0.0
    %154 = vmatmul.mubr.f32.gmra.mrb[0].mxu0 %v71
    %v155 = vpop.f32.mrb[0].mxu0
    %v156 = vadd.f32 0.0, %v155
    %v157 = vpop.f32.mrb[0].mxu0
    %158 = vmatprep.mubr.f32.mxu0 0.0
    %159 = vmatmul.mubr.f32.gmra.mrb[0].mxu0 %v74
    %v160 = vpop.f32.mrb[0].mxu0
    %v161 = vadd.f32 0.0, %v160
    %v162 = vpop.f32.mrb[0].mxu0
    %163 = vmatprep.mubr.f32.mxu0 0.0
    %164 = vmatmul.mubr.f32.gmra.mrb[0].mxu0 %v77
    %v165 = vpop.f32.mrb[0].mxu0
    %v166 = vadd.f32 0.0, %v165
    %v167 = vpop.f32.mrb[0].mxu0
    %168 = vdwg.mxu0
    %v170 = vsel %vm63, %v34, 0
    %v173 = vsel %vm63, %v35, 0
    %v176 = vsel %vm63, %v36, 0
    %v179 = vsel %vm63, %v37, 0
    %v182 = vsel %vm63, %v38, 0
    %184 = vmatprep.subr.mxu0 0.0
    %185 = vmatpush1.msra.mxu0 %v39
    %186 = vmatprep.subr.mxu0 0.0
    %187 = vmatpush1.msra.mxu0 %v40
    %188 = vmatprep.subr.mxu0 0.0
    %189 = vmatpush1.msra.mxu0 %v41
    %190 = vmatprep.subr.mxu0 0.0
    %191 = vmatpush1.msra.mxu0 %v42
    %192 = vmatprep.subr.mxu0 0.0
    %193 = vmatpush1.msra.mxu0 %v43
    %194 = vmatprep.subr.mxu0 0.0
    %195 = vmatpush1.msra.mxu0 %v44
    %196 = vmatprep.subr.mxu0 0.0
    %197 = vmatpush1.msra.mxu0 %v45
    %198 = vmatprep.subr.mxu0 0.0
    %199 = vmatpush1.msra.mxu0 %v46
    %200 = vmatprep.subr.mxu0 0.0
    %201 = vmatpush1.msra.mxu0 %v47
    %202 = vmatprep.subr.mxu0 0.0
    %203 = vmatpush1.msra.mxu0 0.0
    %204 = vmatprep.subr.mxu0 0.0
    %205 = vmatpush1.msra.mxu0 0.0
    %206 = vmatprep.subr.mxu0 0.0
    %207 = vmatpush1.msra.mxu0 0.0
    %208 = vmatprep.subr.mxu0 0.0
    %209 = vmatpush1.msra.mxu0 0.0
    %210 = vmatprep.subr.mxu0 0.0
    %211 = vmatpush1.msra.mxu0 0.0
    %212 = vmatprep.subr.mxu0 0.0
    %213 = vmatpush1.msra.mxu0 0.0
    %214 = vmatprep.subr.mxu0 0.0
    %215 = vmatpush1.msra.mxu0 0.0
    %216 = vmatprep.subr.mxu0 0.0
    %217 = vmatpush1.msra.mxu0 0.0
    %218 = vmatprep.subr.mxu0 0.0
    %219 = vmatpush1.msra.mxu0 0.0
    %220 = vmatprep.subr.mxu0 0.0
    %221 = vmatpush1.msra.mxu0 0.0
    %222 = vmatprep.subr.mxu0 0.0
    %223 = vmatpush1.msra.mxu0 0.0
    %224 = vmatprep.subr.mxu0 0.0
    %225 = vmatpush1.msra.mxu0 0.0
    %226 = vmatprep.subr.mxu0 0.0
    %227 = vmatpush1.msra.mxu0 0.0
    %228 = vmatprep.subr.mxu0 0.0
    %229 = vmatpush1.msra.mxu0 0.0
    %230 = vmatprep.subr.mxu0 0.0
    %231 = vmatpush1.msra.mxu0 0.0
    %232 = vmatprep.subr.mxu0 0.0
    %233 = vmatpush1.msra.mxu0 0.0
    %234 = vmatprep.subr.mxu0 0.0
    %235 = vmatpush1.msra.mxu0 0.0
    %236 = vmatprep.subr.mxu0 0.0
    %237 = vmatpush1.msra.mxu0 0.0
    %238 = vmatprep.subr.mxu0 0.0
    %239 = vmatpush1.msra.mxu0 0.0
    %240 = vmatprep.subr.mxu0 0.0
    %241 = vmatpush1.msra.mxu0 0.0
    %242 = vmatprep.subr.mxu0 0.0
    %243 = vmatpush1.msra.mxu0 0.0
    %244 = vmatprep.subr.mxu0 0.0
    %245 = vmatpush1.msra.mxu0 0.0
    %246 = vmatprep.subr.mxu0 0.0
    %247 = vmatpush1.msra.mxu0 0.0
    %248 = vmatprep.mubr.f32.mxu0 0.0
    %249 = vmatmul.mubr.f32.gmra.mrb[0].mxu0 %v170
    %v250 = vpop.f32.mrb[0].mxu0
    %v251 = vadd.f32 %v146, %v250
    %v252 = vpop.f32.mrb[0].mxu0
    %253 = vmatprep.mubr.f32.mxu0 0.0
    %254 = vmatmul.mubr.f32.gmra.mrb[0].mxu0 %v173
    %v255 = vpop.f32.mrb[0].mxu0
    %v256 = vadd.f32 %v151, %v255
    %v257 = vpop.f32.mrb[0].mxu0
    %258 = vmatprep.mubr.f32.mxu0 0.0
    %259 = vmatmul.mubr.f32.gmra.mrb[0].mxu0 %v176
    %v260 = vpop.f32.mrb[0].mxu0
    %v261 = vadd.f32 %v156, %v260
    %v262 = vpop.f32.mrb[0].mxu0
    %263 = vmatprep.mubr.f32.mxu0 0.0
    %264 = vmatmul.mubr.f32.gmra.mrb[0].mxu0 %v179
    %v265 = vpop.f32.mrb[0].mxu0
    %v266 = vadd.f32 %v161, %v265
    %v267 = vpop.f32.mrb[0].mxu0
    %268 = vmatprep.mubr.f32.mxu0 0.0
    %269 = vmatmul.mubr.f32.gmra.mrb[0].mxu0 %v182
    %v270 = vpop.f32.mrb[0].mxu0
    %v271 = vadd.f32 %v166, %v270
    %v272 = vpop.f32.mrb[0].mxu0
    %273 = vdwg.mxu0
    %v274 = vld [vmem:[%s0 + $0x2] sm:$0xff]
    %v275 = vld [vmem:[%s0 + $0xa] sm:$0xff]
    %v276 = vld [vmem:[%s0 + $0x12] sm:$0xff]
    %v277 = vld [vmem:[%s0 + $0x1a] sm:$0xff]
    %v278 = vld [vmem:[%s0 + $0x22] sm:$0x3]
    %s279 = scalar_lea.vmem [#allocation2], 144
    %v280 = vld [vmem:[%s279] sm:$0xff]
    %v281 = vld [vmem:[%s279 + $0x8] sm:$0xff]
    %v282 = vld [vmem:[%s279 + $0x10] sm:$0xff]
    %v283 = vld [vmem:[%s279 + $0x18] sm:$0xff]
    %v284 = vld [vmem:[%s279 + $0x20] sm:$0xff]
    %v285 = vld [vmem:[%s279 + $0x28] sm:$0xff]
    %v286 = vld [vmem:[%s279 + $0x30] sm:$0xff]
    %v287 = vld [vmem:[%s279 + $0x38] sm:$0xff]
    %v288 = vld [vmem:[%s279 + $0x40] sm:$0xff]
    %v290 = vsel %vm63, %v274, 0
    %v293 = vsel %vm63, %v275, 0
    %v296 = vsel %vm63, %v276, 0
    %v299 = vsel %vm63, %v277, 0
    %v302 = vsel %vm63, %v278, 0
    %304 = vmatprep.subr.mxu0 0.0
    %305 = vmatpush1.msra.mxu0 %v280
    %306 = vmatprep.subr.mxu0 0.0
    %307 = vmatpush1.msra.mxu0 %v281
    %308 = vmatprep.subr.mxu0 0.0
    %309 = vmatpush1.msra.mxu0 %v282
    %310 = vmatprep.subr.mxu0 0.0
    %311 = vmatpush1.msra.mxu0 %v283
    %312 = vmatprep.subr.mxu0 0.0
    %313 = vmatpush1.msra.mxu0 %v284
    %314 = vmatprep.subr.mxu0 0.0
    %315 = vmatpush1.msra.mxu0 %v285
    %316 = vmatprep.subr.mxu0 0.0
    %317 = vmatpush1.msra.mxu0 %v286
    %318 = vmatprep.subr.mxu0 0.0
    %319 = vmatpush1.msra.mxu0 %v287
    %320 = vmatprep.subr.mxu0 0.0
    %321 = vmatpush1.msra.mxu0 %v288
    %322 = vmatprep.subr.mxu0 0.0
    %323 = vmatpush1.msra.mxu0 0.0
    %324 = vmatprep.subr.mxu0 0.0
    %325 = vmatpush1.msra.mxu0 0.0
    %326 = vmatprep.subr.mxu0 0.0
    %327 = vmatpush1.msra.mxu0 0.0
    %328 = vmatprep.subr.mxu0 0.0
    %329 = vmatpush1.msra.mxu0 0.0
    %330 = vmatprep.subr.mxu0 0.0
    %331 = vmatpush1.msra.mxu0 0.0
    %332 = vmatprep.subr.mxu0 0.0
    %333 = vmatpush1.msra.mxu0 0.0
    %334 = vmatprep.subr.mxu0 0.0
    %335 = vmatpush1.msra.mxu0 0.0
    %336 = vmatprep.subr.mxu0 0.0
    %337 = vmatpush1.msra.mxu0 0.0
    %338 = vmatprep.subr.mxu0 0.0
    %339 = vmatpush1.msra.mxu0 0.0
    %340 = vmatprep.subr.mxu0 0.0
    %341 = vmatpush1.msra.mxu0 0.0
    %342 = vmatprep.subr.mxu0 0.0
    %343 = vmatpush1.msra.mxu0 0.0
    %344 = vmatprep.subr.mxu0 0.0
    %345 = vmatpush1.msra.mxu0 0.0
    %346 = vmatprep.subr.mxu0 0.0
    %347 = vmatpush1.msra.mxu0 0.0
    %348 = vmatprep.subr.mxu0 0.0
    %349 = vmatpush1.msra.mxu0 0.0
    %350 = vmatprep.subr.mxu0 0.0
    %351 = vmatpush1.msra.mxu0 0.0
    %352 = vmatprep.subr.mxu0 0.0
    %353 = vmatpush1.msra.mxu0 0.0
    %354 = vmatprep.subr.mxu0 0.0
    %355 = vmatpush1.msra.mxu0 0.0
    %356 = vmatprep.subr.mxu0 0.0
    %357 = vmatpush1.msra.mxu0 0.0
    %358 = vmatprep.subr.mxu0 0.0
    %359 = vmatpush1.msra.mxu0 0.0
    %360 = vmatprep.subr.mxu0 0.0
    %361 = vmatpush1.msra.mxu0 0.0
    %362 = vmatprep.subr.mxu0 0.0
    %363 = vmatpush1.msra.mxu0 0.0
    %364 = vmatprep.subr.mxu0 0.0
    %365 = vmatpush1.msra.mxu0 0.0
    %366 = vmatprep.subr.mxu0 0.0
    %367 = vmatpush1.msra.mxu0 0.0
    %368 = vmatprep.mubr.f32.mxu0 0.0
    %369 = vmatmul.mubr.f32.gmra.mrb[0].mxu0 %v290
    %v370 = vpop.f32.mrb[0].mxu0
    %v371 = vadd.f32 0.0, %v370
    %v372 = vpop.f32.mrb[0].mxu0
    %373 = vmatprep.mubr.f32.mxu0 0.0
    %374 = vmatmul.mubr.f32.gmra.mrb[0].mxu0 %v293
    %v375 = vpop.f32.mrb[0].mxu0
    %v376 = vadd.f32 0.0, %v375
    %v377 = vpop.f32.mrb[0].mxu0
    %378 = vmatprep.mubr.f32.mxu0 0.0
    %379 = vmatmul.mubr.f32.gmra.mrb[0].mxu0 %v296
    %v380 = vpop.f32.mrb[0].mxu0
    %v381 = vadd.f32 0.0, %v380
    %v382 = vpop.f32.mrb[0].mxu0
    %383 = vmatprep.mubr.f32.mxu0 0.0
    %384 = vmatmul.mubr.f32.gmra.mrb[0].mxu0 %v299
    %v385 = vpop.f32.mrb[0].mxu0
    %v386 = vadd.f32 0.0, %v385
    %v387 = vpop.f32.mrb[0].mxu0
    %388 = vmatprep.mubr.f32.mxu0 0.0
    %389 = vmatmul.mubr.f32.gmra.mrb[0].mxu0 %v302
    %v390 = vpop.f32.mrb[0].mxu0
    %v391 = vadd.f32 0.0, %v390
    %v392 = vpop.f32.mrb[0].mxu0
    %393 = vdwg.mxu0
    %v394 = vadd.f32 %v251, %v371
    %v395 = vadd.f32 %v256, %v376
    %v396 = vadd.f32 %v261, %v381
    %v397 = vadd.f32 %v266, %v386
    %v398 = vadd.f32 %v271, %v391
    %v399 = vld [vmem:[%s2] sm:$0x1]
    %v401 = vlaneseq
    %v402 = vshrl.u32 %v401, 7
    %v403 = vsub.s32 0, %v402
    %v404 = vrot.slane %v399, %v403
    %v406 = vadd.f32 %v394, %v404
    %v407 = vadd.f32 %v395, %v404
    %v408 = vadd.f32 %v396, %v404
    %v409 = vadd.f32 %v397, %v404
    %v410 = vadd.f32 %v398, %v404
    %v411 = vmax.f32 %v406, 0.0
    %v412 = vmax.f32 %v407, 0.0
    %v413 = vmax.f32 %v408, 0.0
    %v414 = vmax.f32 %v409, 0.0
    %v415 = vmax.f32 %v410, 0.0
    %v416 = vld [vmem:[%s3] sm:$0xff]
    %v417 = vld [vmem:[%s3 + $0x8] sm:$0xff]
    %v418 = vld [vmem:[%s3 + $0x10] sm:$0xff]
    %v419 = vld [vmem:[%s3 + $0x18] sm:$0xff]
    %v420 = vld [vmem:[%s3 + $0x20] sm:$0xff]
    %v421 = vld [vmem:[%s3 + $0x28] sm:$0xff]
    %v422 = vld [vmem:[%s3 + $0x30] sm:$0xff]
    %v423 = vld [vmem:[%s3 + $0x38] sm:$0xff]
    %v424 = vld [vmem:[%s3 + $0x40] sm:$0xff]
    %v425 = vld [vmem:[%s3 + $0x48] sm:$0xff]
    %v426 = vld [vmem:[%s3 + $0x50] sm:$0xff]
    %v427 = vld [vmem:[%s3 + $0x58] sm:$0xff]
    %v428 = vld [vmem:[%s3 + $0x60] sm:$0xff]
    %v429 = vld [vmem:[%s3 + $0x68] sm:$0xff]
    %v430 = vld [vmem:[%s3 + $0x70] sm:$0xff]
    %v431 = vld [vmem:[%s3 + $0x78] sm:$0xff]
    %v432 = vld [vmem:[%s3 + $0x80] sm:$0xff]
    %v433 = vld [vmem:[%s3 + $0x88] sm:$0xff]
    %v434 = vld [vmem:[%s3 + $0x90] sm:$0xff]
    %v435 = vld [vmem:[%s3 + $0x98] sm:$0xff]
    %v436 = vld [vmem:[%s3 + $0xa0] sm:$0xff]
    %v437 = vld [vmem:[%s3 + $0xa8] sm:$0xff]
    %v438 = vld [vmem:[%s3 + $0xb0] sm:$0xff]
    %v439 = vld [vmem:[%s3 + $0xb8] sm:$0xff]
    %v440 = vld [vmem:[%s3 + $0xc0] sm:$0xff]
    %v441 = vld [vmem:[%s3 + $0xc8] sm:$0xff]
    %v442 = vld [vmem:[%s3 + $0xd0] sm:$0xff]
    %v443 = vld [vmem:[%s3 + $0xd8] sm:$0xff]
    %v444 = vld [vmem:[%s3 + $0xe0] sm:$0xff]
    %v445 = vld [vmem:[%s3 + $0xe8] sm:$0xff]
    %v446 = vld [vmem:[%s3 + $0xf0] sm:$0xff]
    %v447 = vld [vmem:[%s3 + $0xf8] sm:$0xff]
    %s448 = scalar_lea.vmem %s3, 256
    %v449 = vld [vmem:[%s448] sm:$0xff]
    %v450 = vld [vmem:[%s448 + $0x8] sm:$0xff]
    %v451 = vld [vmem:[%s448 + $0x10] sm:$0xff]
    %v452 = vld [vmem:[%s448 + $0x18] sm:$0xff]
    %v453 = vld [vmem:[%s448 + $0x20] sm:$0xff]
    %v454 = vld [vmem:[%s448 + $0x28] sm:$0xff]
    %v455 = vld [vmem:[%s448 + $0x30] sm:$0xff]
    %v456 = vld [vmem:[%s448 + $0x38] sm:$0xff]
    %v457 = vld [vmem:[%s448 + $0x40] sm:$0xff]
    %v458 = vld [vmem:[%s448 + $0x48] sm:$0xff]
    %v459 = vld [vmem:[%s448 + $0x50] sm:$0xff]
    %v460 = vld [vmem:[%s448 + $0x58] sm:$0xff]
    %v461 = vld [vmem:[%s448 + $0x60] sm:$0xff]
    %v462 = vld [vmem:[%s448 + $0x68] sm:$0xff]
    %v463 = vld [vmem:[%s448 + $0x70] sm:$0xff]
    %v464 = vld [vmem:[%s448 + $0x78] sm:$0xff]
    %v465 = vld [vmem:[%s448 + $0x80] sm:$0xff]
    %v466 = vld [vmem:[%s448 + $0x88] sm:$0xff]
    %v467 = vld [vmem:[%s448 + $0x90] sm:$0xff]
    %v468 = vld [vmem:[%s448 + $0x98] sm:$0xff]
    %v469 = vld [vmem:[%s448 + $0xa0] sm:$0xff]
    %v470 = vld [vmem:[%s448 + $0xa8] sm:$0xff]
    %v471 = vld [vmem:[%s448 + $0xb0] sm:$0xff]
    %v472 = vld [vmem:[%s448 + $0xb8] sm:$0xff]
    %v473 = vld [vmem:[%s448 + $0xc0] sm:$0xff]
    %v474 = vld [vmem:[%s448 + $0xc8] sm:$0xff]
    %v475 = vld [vmem:[%s448 + $0xd0] sm:$0xff]
    %v476 = vld [vmem:[%s448 + $0xd8] sm:$0xff]
    %v477 = vld [vmem:[%s448 + $0xe0] sm:$0xff]
    %v478 = vld [vmem:[%s448 + $0xe8] sm:$0xff]
    %v479 = vld [vmem:[%s448 + $0xf0] sm:$0xff]
    %v480 = vld [vmem:[%s448 + $0xf8] sm:$0xff]
    %vm486 = vcmask 1046528
    %v487 = vrot.slane %v411, 1
    %v488 = vrot.slane %v412, 1
    %v489 = vsel %vm486, %v487, %v488
    %v490 = vrot.slane %v413, 1
    %v491 = vsel %vm486, %v488, %v490
    %v492 = vrot.slane %v414, 1
    %v493 = vsel %vm486, %v490, %v492
    %v494 = vrot.slane %v415, 1
    %v495 = vsel %vm486, %v492, %v494
    %500 = vmatprep.subr.mxu0 %v450
    %501 = vmatpush1.msra.mxu0 %v449
    %502 = vmatprep.subr.mxu0 %v452
    %503 = vmatpush1.msra.mxu0 %v451
    %504 = vmatprep.subr.mxu0 %v454
    %505 = vmatpush1.msra.mxu0 %v453
    %506 = vmatprep.subr.mxu0 %v456
    %507 = vmatpush1.msra.mxu0 %v455
    %508 = vmatprep.subr.mxu0 %v458
    %509 = vmatpush1.msra.mxu0 %v457
    %510 = vmatprep.subr.mxu0 %v460
    %511 = vmatpush1.msra.mxu0 %v459
    %512 = vmatprep.subr.mxu0 %v462
    %513 = vmatpush1.msra.mxu0 %v461
    %514 = vmatprep.subr.mxu0 %v464
    %515 = vmatpush1.msra.mxu0 %v463
    %516 = vmatprep.subr.mxu0 %v466
    %517 = vmatpush1.msra.mxu0 %v465
    %518 = vmatprep.subr.mxu0 %v468
    %519 = vmatpush1.msra.mxu0 %v467
    %520 = vmatprep.subr.mxu0 %v470
    %521 = vmatpush1.msra.mxu0 %v469
    %522 = vmatprep.subr.mxu0 %v472
    %523 = vmatpush1.msra.mxu0 %v471
    %524 = vmatprep.subr.mxu0 %v474
    %525 = vmatpush1.msra.mxu0 %v473
    %526 = vmatprep.subr.mxu0 %v476
    %527 = vmatpush1.msra.mxu0 %v475
    %528 = vmatprep.subr.mxu0 %v478
    %529 = vmatpush1.msra.mxu0 %v477
    %530 = vmatprep.subr.mxu0 %v480
    %531 = vmatpush1.msra.mxu0 %v479
    %532 = vmatprep.subr.mxu0 0.0
    %533 = vmatpush1.msra.mxu0 0.0
    %534 = vmatprep.subr.mxu0 0.0
    %535 = vmatpush1.msra.mxu0 0.0
    %536 = vmatprep.subr.mxu0 0.0
    %537 = vmatpush1.msra.mxu0 0.0
    %538 = vmatprep.subr.mxu0 0.0
    %539 = vmatpush1.msra.mxu0 0.0
    %540 = vmatprep.subr.mxu0 0.0
    %541 = vmatpush1.msra.mxu0 0.0
    %542 = vmatprep.subr.mxu0 0.0
    %543 = vmatpush1.msra.mxu0 0.0
    %544 = vmatprep.subr.mxu0 0.0
    %545 = vmatpush1.msra.mxu0 0.0
    %546 = vmatprep.subr.mxu0 0.0
    %547 = vmatpush1.msra.mxu0 0.0
    %548 = vmatprep.subr.mxu0 0.0
    %549 = vmatpush1.msra.mxu0 0.0
    %550 = vmatprep.subr.mxu0 0.0
    %551 = vmatpush1.msra.mxu0 0.0
    %552 = vmatprep.subr.mxu0 0.0
    %553 = vmatpush1.msra.mxu0 0.0
    %554 = vmatprep.subr.mxu0 0.0
    %555 = vmatpush1.msra.mxu0 0.0
    %556 = vmatprep.subr.mxu0 0.0
    %557 = vmatpush1.msra.mxu0 0.0
    %558 = vmatprep.subr.mxu0 0.0
    %559 = vmatpush1.msra.mxu0 0.0
    %560 = vmatprep.subr.mxu0 0.0
    %561 = vmatpush1.msra.mxu0 0.0
    %562 = vmatprep.subr.mxu0 0.0
    %563 = vmatpush1.msra.mxu0 0.0
    %564 = vmatprep.mubr.f32.mxu0 0.0
    %565 = vmatmul.mubr.f32.gmra.mrb[0].mxu0 %v489
    %v566 = vpop.f32.mrb[0].mxu0
    %v567 = vadd.f32 0.0, %v566
    %v568 = vpop.f32.mrb[0].mxu0
    %v569 = vadd.f32 0.0, %v568
    %570 = vmatprep.mubr.f32.mxu0 0.0
    %571 = vmatmul.mubr.f32.gmra.mrb[0].mxu0 %v491
    %v572 = vpop.f32.mrb[0].mxu0
    %v573 = vadd.f32 0.0, %v572
    %v574 = vpop.f32.mrb[0].mxu0
    %v575 = vadd.f32 0.0, %v574
    %576 = vmatprep.mubr.f32.mxu0 0.0
    %577 = vmatmul.mubr.f32.gmra.mrb[0].mxu0 %v493
    %v578 = vpop.f32.mrb[0].mxu0
    %v579 = vadd.f32 0.0, %v578
    %v580 = vpop.f32.mrb[0].mxu0
    %v581 = vadd.f32 0.0, %v580
    %582 = vmatprep.mubr.f32.mxu0 0.0
    %583 = vmatmul.mubr.f32.gmra.mrb[0].mxu0 %v495
    %v584 = vpop.f32.mrb[0].mxu0
    %v585 = vadd.f32 0.0, %v584
    %v586 = vpop.f32.mrb[0].mxu0
    %v587 = vadd.f32 0.0, %v586
    %588 = vdwg.mxu0
    %589 = vmatprep.subr.mxu0 %v417
    %590 = vmatpush1.msra.mxu0 %v416
    %591 = vmatprep.subr.mxu0 %v419
    %592 = vmatpush1.msra.mxu0 %v418
    %593 = vmatprep.subr.mxu0 %v421
    %594 = vmatpush1.msra.mxu0 %v420
    %595 = vmatprep.subr.mxu0 %v423
    %596 = vmatpush1.msra.mxu0 %v422
    %597 = vmatprep.subr.mxu0 %v425
    %598 = vmatpush1.msra.mxu0 %v424
    %599 = vmatprep.subr.mxu0 %v427
    %600 = vmatpush1.msra.mxu0 %v426
    %601 = vmatprep.subr.mxu0 %v429
    %602 = vmatpush1.msra.mxu0 %v428
    %603 = vmatprep.subr.mxu0 %v431
    %604 = vmatpush1.msra.mxu0 %v430
    %605 = vmatprep.subr.mxu0 %v433
    %606 = vmatpush1.msra.mxu0 %v432
    %607 = vmatprep.subr.mxu0 %v435
    %608 = vmatpush1.msra.mxu0 %v434
    %609 = vmatprep.subr.mxu0 %v437
    %610 = vmatpush1.msra.mxu0 %v436
    %611 = vmatprep.subr.mxu0 %v439
    %612 = vmatpush1.msra.mxu0 %v438
    %613 = vmatprep.subr.mxu0 %v441
    %614 = vmatpush1.msra.mxu0 %v440
    %615 = vmatprep.subr.mxu0 %v443
    %616 = vmatpush1.msra.mxu0 %v442
    %617 = vmatprep.subr.mxu0 %v445
    %618 = vmatpush1.msra.mxu0 %v444
    %619 = vmatprep.subr.mxu0 %v447
    %620 = vmatpush1.msra.mxu0 %v446
    %621 = vmatprep.subr.mxu0 0.0
    %622 = vmatpush1.msra.mxu0 0.0
    %623 = vmatprep.subr.mxu0 0.0
    %624 = vmatpush1.msra.mxu0 0.0
    %625 = vmatprep.subr.mxu0 0.0
    %626 = vmatpush1.msra.mxu0 0.0
    %627 = vmatprep.subr.mxu0 0.0
    %628 = vmatpush1.msra.mxu0 0.0
    %629 = vmatprep.subr.mxu0 0.0
    %630 = vmatpush1.msra.mxu0 0.0
    %631 = vmatprep.subr.mxu0 0.0
    %632 = vmatpush1.msra.mxu0 0.0
    %633 = vmatprep.subr.mxu0 0.0
    %634 = vmatpush1.msra.mxu0 0.0
    %635 = vmatprep.subr.mxu0 0.0
    %636 = vmatpush1.msra.mxu0 0.0
    %637 = vmatprep.subr.mxu0 0.0
    %638 = vmatpush1.msra.mxu0 0.0
    %639 = vmatprep.subr.mxu0 0.0
    %640 = vmatpush1.msra.mxu0 0.0
    %641 = vmatprep.subr.mxu0 0.0
    %642 = vmatpush1.msra.mxu0 0.0
    %643 = vmatprep.subr.mxu0 0.0
    %644 = vmatpush1.msra.mxu0 0.0
    %645 = vmatprep.subr.mxu0 0.0
    %646 = vmatpush1.msra.mxu0 0.0
    %647 = vmatprep.subr.mxu0 0.0
    %648 = vmatpush1.msra.mxu0 0.0
    %649 = vmatprep.subr.mxu0 0.0
    %650 = vmatpush1.msra.mxu0 0.0
    %651 = vmatprep.subr.mxu0 0.0
    %652 = vmatpush1.msra.mxu0 0.0
    %653 = vmatprep.mubr.f32.mxu0 0.0
    %654 = vmatmul.mubr.f32.gmra.mrb[0].mxu0 %v411
    %v655 = vpop.f32.mrb[0].mxu0
    %v656 = vadd.f32 %v567, %v655
    %v657 = vpop.f32.mrb[0].mxu0
    %v658 = vadd.f32 %v569, %v657
    %659 = vmatprep.mubr.f32.mxu0 0.0
    %660 = vmatmul.mubr.f32.gmra.mrb[0].mxu0 %v412
    %v661 = vpop.f32.mrb[0].mxu0
    %v662 = vadd.f32 %v573, %v661
    %v663 = vpop.f32.mrb[0].mxu0
    %v664 = vadd.f32 %v575, %v663
    %665 = vmatprep.mubr.f32.mxu0 0.0
    %666 = vmatmul.mubr.f32.gmra.mrb[0].mxu0 %v413
    %v667 = vpop.f32.mrb[0].mxu0
    %v668 = vadd.f32 %v579, %v667
    %v669 = vpop.f32.mrb[0].mxu0
    %v670 = vadd.f32 %v581, %v669
    %671 = vmatprep.mubr.f32.mxu0 0.0
    %672 = vmatmul.mubr.f32.gmra.mrb[0].mxu0 %v414
    %v673 = vpop.f32.mrb[0].mxu0
    %v674 = vadd.f32 %v585, %v673
    %v675 = vpop.f32.mrb[0].mxu0
    %v676 = vadd.f32 %v587, %v675
    %677 = vdwg.mxu0
    %s678 = scalar_lea.vmem %s3, 512
    %v679 = vld [vmem:[%s678] sm:$0xff]
    %v680 = vld [vmem:[%s678 + $0x8] sm:$0xff]
    %v681 = vld [vmem:[%s678 + $0x10] sm:$0xff]
    %v682 = vld [vmem:[%s678 + $0x18] sm:$0xff]
    %v683 = vld [vmem:[%s678 + $0x20] sm:$0xff]
    %v684 = vld [vmem:[%s678 + $0x28] sm:$0xff]
    %v685 = vld [vmem:[%s678 + $0x30] sm:$0xff]
    %v686 = vld [vmem:[%s678 + $0x38] sm:$0xff]
    %v687 = vld [vmem:[%s678 + $0x40] sm:$0xff]
    %v688 = vld [vmem:[%s678 + $0x48] sm:$0xff]
    %v689 = vld [vmem:[%s678 + $0x50] sm:$0xff]
    %v690 = vld [vmem:[%s678 + $0x58] sm:$0xff]
    %v691 = vld [vmem:[%s678 + $0x60] sm:$0xff]
    %v692 = vld [vmem:[%s678 + $0x68] sm:$0xff]
    %v693 = vld [vmem:[%s678 + $0x70] sm:$0xff]
    %v694 = vld [vmem:[%s678 + $0x78] sm:$0xff]
    %v695 = vld [vmem:[%s678 + $0x80] sm:$0xff]
    %v696 = vld [vmem:[%s678 + $0x88] sm:$0xff]
    %v697 = vld [vmem:[%s678 + $0x90] sm:$0xff]
    %v698 = vld [vmem:[%s678 + $0x98] sm:$0xff]
    %v699 = vld [vmem:[%s678 + $0xa0] sm:$0xff]
    %v700 = vld [vmem:[%s678 + $0xa8] sm:$0xff]
    %v701 = vld [vmem:[%s678 + $0xb0] sm:$0xff]
    %v702 = vld [vmem:[%s678 + $0xb8] sm:$0xff]
    %v703 = vld [vmem:[%s678 + $0xc0] sm:$0xff]
    %v704 = vld [vmem:[%s678 + $0xc8] sm:$0xff]
    %v705 = vld [vmem:[%s678 + $0xd0] sm:$0xff]
    %v706 = vld [vmem:[%s678 + $0xd8] sm:$0xff]
    %v707 = vld [vmem:[%s678 + $0xe0] sm:$0xff]
    %v708 = vld [vmem:[%s678 + $0xe8] sm:$0xff]
    %v709 = vld [vmem:[%s678 + $0xf0] sm:$0xff]
    %v710 = vld [vmem:[%s678 + $0xf8] sm:$0xff]
    %vm711 = vcmask 1045504
    %v712 = vrot.slane %v411, 2
    %v713 = vrot.slane %v412, 2
    %v714 = vsel %vm711, %v712, %v713
    %v715 = vrot.slane %v413, 2
    %v716 = vsel %vm711, %v713, %v715
    %v717 = vrot.slane %v414, 2
    %v718 = vsel %vm711, %v715, %v717
    %v719 = vrot.slane %v415, 2
    %v720 = vsel %vm711, %v717, %v719
    %725 = vmatprep.subr.mxu0 %v680
    %726 = vmatpush1.msra.mxu0 %v679
    %727 = vmatprep.subr.mxu0 %v682
    %728 = vmatpush1.msra.mxu0 %v681
    %729 = vmatprep.subr.mxu0 %v684
    %730 = vmatpush1.msra.mxu0 %v683
    %731 = vmatprep.subr.mxu0 %v686
    %732 = vmatpush1.msra.mxu0 %v685
    %733 = vmatprep.subr.mxu0 %v688
    %734 = vmatpush1.msra.mxu0 %v687
    %735 = vmatprep.subr.mxu0 %v690
    %736 = vmatpush1.msra.mxu0 %v689
    %737 = vmatprep.subr.mxu0 %v692
    %738 = vmatpush1.msra.mxu0 %v691
    %739 = vmatprep.subr.mxu0 %v694
    %740 = vmatpush1.msra.mxu0 %v693
    %741 = vmatprep.subr.mxu0 %v696
    %742 = vmatpush1.msra.mxu0 %v695
    %743 = vmatprep.subr.mxu0 %v698
    %744 = vmatpush1.msra.mxu0 %v697
    %745 = vmatprep.subr.mxu0 %v700
    %746 = vmatpush1.msra.mxu0 %v699
    %747 = vmatprep.subr.mxu0 %v702
    %748 = vmatpush1.msra.mxu0 %v701
    %749 = vmatprep.subr.mxu0 %v704
    %750 = vmatpush1.msra.mxu0 %v703
    %751 = vmatprep.subr.mxu0 %v706
    %752 = vmatpush1.msra.mxu0 %v705
    %753 = vmatprep.subr.mxu0 %v708
    %754 = vmatpush1.msra.mxu0 %v707
    %755 = vmatprep.subr.mxu0 %v710
    %756 = vmatpush1.msra.mxu0 %v709
    %757 = vmatprep.subr.mxu0 0.0
    %758 = vmatpush1.msra.mxu0 0.0
    %759 = vmatprep.subr.mxu0 0.0
    %760 = vmatpush1.msra.mxu0 0.0
    %761 = vmatprep.subr.mxu0 0.0
    %762 = vmatpush1.msra.mxu0 0.0
    %763 = vmatprep.subr.mxu0 0.0
    %764 = vmatpush1.msra.mxu0 0.0
    %765 = vmatprep.subr.mxu0 0.0
    %766 = vmatpush1.msra.mxu0 0.0
    %767 = vmatprep.subr.mxu0 0.0
    %768 = vmatpush1.msra.mxu0 0.0
    %769 = vmatprep.subr.mxu0 0.0
    %770 = vmatpush1.msra.mxu0 0.0
    %771 = vmatprep.subr.mxu0 0.0
    %772 = vmatpush1.msra.mxu0 0.0
    %773 = vmatprep.subr.mxu0 0.0
    %774 = vmatpush1.msra.mxu0 0.0
    %775 = vmatprep.subr.mxu0 0.0
    %776 = vmatpush1.msra.mxu0 0.0
    %777 = vmatprep.subr.mxu0 0.0
    %778 = vmatpush1.msra.mxu0 0.0
    %779 = vmatprep.subr.mxu0 0.0
    %780 = vmatpush1.msra.mxu0 0.0
    %781 = vmatprep.subr.mxu0 0.0
    %782 = vmatpush1.msra.mxu0 0.0
    %783 = vmatprep.subr.mxu0 0.0
    %784 = vmatpush1.msra.mxu0 0.0
    %785 = vmatprep.subr.mxu0 0.0
    %786 = vmatpush1.msra.mxu0 0.0
    %787 = vmatprep.subr.mxu0 0.0
    %788 = vmatpush1.msra.mxu0 0.0
    %789 = vmatprep.mubr.f32.mxu0 0.0
    %790 = vmatmul.mubr.f32.gmra.mrb[0].mxu0 %v714
    %v791 = vpop.f32.mrb[0].mxu0
    %v792 = vadd.f32 0.0, %v791
    %v793 = vpop.f32.mrb[0].mxu0
    %v794 = vadd.f32 0.0, %v793
    %795 = vmatprep.mubr.f32.mxu0 0.0
    %796 = vmatmul.mubr.f32.gmra.mrb[0].mxu0 %v716
    %v797 = vpop.f32.mrb[0].mxu0
    %v798 = vadd.f32 0.0, %v797
    %v799 = vpop.f32.mrb[0].mxu0
    %v800 = vadd.f32 0.0, %v799
    %801 = vmatprep.mubr.f32.mxu0 0.0
    %802 = vmatmul.mubr.f32.gmra.mrb[0].mxu0 %v718
    %v803 = vpop.f32.mrb[0].mxu0
    %v804 = vadd.f32 0.0, %v803
    %v805 = vpop.f32.mrb[0].mxu0
    %v806 = vadd.f32 0.0, %v805
    %807 = vmatprep.mubr.f32.mxu0 0.0
    %808 = vmatmul.mubr.f32.gmra.mrb[0].mxu0 %v720
    %v809 = vpop.f32.mrb[0].mxu0
    %v810 = vadd.f32 0.0, %v809
    %v811 = vpop.f32.mrb[0].mxu0
    %v812 = vadd.f32 0.0, %v811
    %813 = vdwg.mxu0
    %v814 = vadd.f32 %v656, %v792
    %v815 = vadd.f32 %v658, %v794
    %v816 = vadd.f32 %v662, %v798
    %v817 = vadd.f32 %v664, %v800
    %v818 = vadd.f32 %v668, %v804
    %v819 = vadd.f32 %v670, %v806
    %v820 = vadd.f32 %v674, %v810
    %v821 = vadd.f32 %v676, %v812
    %v822 = vld [vmem:[%s4] sm:$0x3]
    %v824 = vlaneseq
    %v825 = vshrl.u32 %v824, 7
    %v826 = vsub.s32 0, %v825
    %v827 = vrot.slane %v822, %v826
    %v828 = vlaneseq
    %v829 = vshrl.u32 %v828, 7
    %v830 = vsub.s32 1, %v829
    %v831 = vrot.slane %v822, %v830
    %v834 = vadd.f32 %v814, %v827
    %v835 = vadd.f32 %v815, %v831
    %v836 = vadd.f32 %v816, %v827
    %v837 = vadd.f32 %v817, %v831
    %v838 = vadd.f32 %v818, %v827
    %v839 = vadd.f32 %v819, %v831
    %v840 = vadd.f32 %v820, %v827
    %v841 = vadd.f32 %v821, %v831
    %v842 = vmax.f32 %v834, 0.0
    %v843 = vmax.f32 %v835, 0.0
    %v844 = vmax.f32 %v836, 0.0
    %v845 = vmax.f32 %v837, 0.0
    %v846 = vmax.f32 %v838, 0.0
    %v847 = vmax.f32 %v839, 0.0
    %v848 = vmax.f32 %v840, 0.0
    %v849 = vmax.f32 %v841, 0.0
    %850 = vst [vmem:[%s5] sm:$0xff] %v842
    %851 = vst [vmem:[%s5 + $0x8] sm:$0xff] %v843
    %852 = vst [vmem:[%s5 + $0x10] sm:$0x3f] %v844
    %853 = vst [vmem:[%s5 + $0x18] sm:$0x3f] %v845
    %vm858 = vcmask 1043456
    %v859 = vrot.slane %v846, 4
    %v860 = vrot.slane %v847, 4
    %v861 = vrot.slane %v848, 4
    %v862 = vsel %vm858, %v859, %v861
    %v863 = vrot.slane %v849, 4
    %v864 = vsel %vm858, %v860, %v863
    %871 = vst [vmem:[%s5 + $0x10] sm:$0xc0] %v859
    %872 = vst [vmem:[%s5 + $0x18] sm:$0xc0] %v860
    %873 = vst [vmem:[%s5 + $0x20] sm:$0xff] %v862
    %874 = vst [vmem:[%s5 + $0x28] sm:$0xff] %v864
    %875 = vst [vmem:[%s5 + $0x30] sm:$0xf] %v861
    %876 = vst [vmem:[%s5 + $0x38] sm:$0xf] %v863
    // Predicated region
    $region26: #{forward.1} parent=1 // pred_check
      _
    $region27: #{forward.1} parent=1 // pred_check_branch
      %878 = sbr.rel (0) target = $region29
    $region28: #{forward.1} parent=1 // pred_region
      _
    $region29: #{forward.1} parent=1 // pred_fallthru
      _
    // Predicated region
    $region30: #{forward.1} parent=1 // pred_check
      _
    $region31: #{forward.1} parent=1 // pred_check_branch
      %880 = sbr.rel (0) target = $region33
    $region32: #{forward.1} parent=1 // pred_region
      _
    $region33: #{forward.1} parent=1 // pred_fallthru
      _
    %881 = vsyncpa [#allocation3], 1

</llo_original>
